<compile_context>
chip_gen: v6e
topology: v6e:2x2x1
jax: 0.10.0
libtpu: 0.0.40
codegen_flags: <defaults>
</compile_context>

<pallas_src>
import functools

import jax
import jax.numpy as jnp
from jax import lax
from jax.experimental import pallas as pl
from jax.experimental.pallas import tpu as pltpu


def _lora_kernel(x_ref, wd_ref, wut_ref, o_ref, h_ref):
    # Compute h = x @ W_down^T only on the first out_features tile of each
    # batch tile; reuse the f32 scratch for all subsequent j.
    @pl.when(pl.program_id(1) == 0)
    def _():
        h_ref[...] = lax.dot_general(
            x_ref[...],
            wd_ref[...],
            (((1,), (1,)), ((), ())),      # contract in_features vs in_features
            preferred_element_type=jnp.float32,
        )
    # y = h @ (W_up^T * scaling); W_up_t is already lane-dense (r, tn) and
    # pre-scaled on the host, so this is a plain MXU matmul + cast.
    h = h_ref[...].astype(wut_ref.dtype)
    y = jnp.dot(h, wut_ref[...], preferred_element_type=jnp.float32)
    o_ref[...] = y.astype(o_ref.dtype)


def _vmem_bytes(tm, tn, in_features, r, in_bytes, out_bytes):
    """Double-buffered input/output tiles + the f32 h scratch (lanes pad to 128)."""
    x_tile = tm * in_features * in_bytes
    wd = r * in_features * in_bytes
    wu = r * tn * in_bytes
    o_tile = tm * tn * out_bytes
    h_scratch = tm * 128 * 4
    return 2 * (x_tile + wd + wu + o_tile) + h_scratch


def _candidates(dim, prefs):
    cands = {c for c in prefs if c <= dim and dim % c == 0}
    cands.add(dim)  # full extent is always legal
    return sorted(cands, reverse=True)


def lora_forward(x, w_down, w_up, *, alpha=16, tm=None, tn=None):
    """LoRALayer.forward: lora_up(lora_down(x)) * (alpha / r).

    x:      (batch, in_features)
    w_down: (r, in_features)        -- PyTorch lora_down.weight
    w_up:   (out_features, r)       -- PyTorch lora_up.weight
    """
    batch, in_features = x.shape
    r, in_features_w = w_down.shape
    out_features, r_w = w_up.shape
    assert in_features == in_features_w and r == r_w
    scaling = alpha / r

    # Host-side, one-time prep: lane-dense (r, out_features) with scaling folded in.
    w_up_t = (w_up.T * jnp.asarray(scaling, dtype=jnp.float32)).astype(w_up.dtype)

    in_bytes = jnp.dtype(x.dtype).itemsize
    out_dtype = x.dtype
    out_bytes = jnp.dtype(out_dtype).itemsize

    # Tile selection under a VMEM budget that is safe on every generation
    # (v5e 16 MiB default scoped limit, v6e/v7x 32 MiB default, v7x 64 MiB
    # physical).  Mem-bound kernel -> prefer the largest batch tile first,
    # then the widest lane-dense output tile that still fits.
    budget = 24 * 1024 * 1024
    tm_cands = _candidates(batch, (1024, 512, 256, 128, 64, 32, 16, 8))
    tn_cands = _candidates(out_features, (4096, 2048, 1024, 512, 256, 128))
    if tm is None or tn is None:
        chosen = None
        for cand_m in tm_cands:
            for cand_n in tn_cands:
                if _vmem_bytes(cand_m, cand_n, in_features, r, in_bytes, out_bytes) <= budget:
                    chosen = (cand_m, cand_n)
                    break
            if chosen is not None:
                break
        if chosen is None:  # pathological shapes: fall back to the smallest tiles
            chosen = (tm_cands[-1], tn_cands[-1])
        tm = tm if tm is not None else chosen[0]
        tn = tn if tn is not None else chosen[1]
    assert batch % tm == 0 and out_features % tn == 0

    grid = (batch // tm, out_features // tn)

    needed = _vmem_bytes(tm, tn, in_features, r, in_bytes, out_bytes)
    vmem_limit = min(64 * 1024 * 1024, max(needed + 4 * 1024 * 1024, 16 * 1024 * 1024))

    cost = pl.CostEstimate(
        flops=2 * batch * r * (in_features + out_features),
        transcendentals=0,
        bytes_accessed=(
            batch * in_features * in_bytes
            + r * in_features * in_bytes
            + r * out_features * in_bytes
            + batch * out_features * out_bytes
        ),
    )

    return pl.pallas_call(
        _lora_kernel,
        out_shape=jax.ShapeDtypeStruct((batch, out_features), out_dtype),
        grid_spec=pltpu.PrefetchScalarGridSpec(
            num_scalar_prefetch=0,
            grid=grid,
            in_specs=[
                # x: tiled over batch, full in_features; index invariant in j so
                # the tile is DMA'd once per batch tile.
                pl.BlockSpec((tm, in_features), lambda i, j: (i, 0)),
                # w_down: small (r, in) -> VMEM-resident across the whole grid.
                pl.BlockSpec((r, in_features), lambda i, j: (0, 0)),
                # w_up_t: lane-dense (r, out_features), tiled over out_features.
                pl.BlockSpec((r, tn), lambda i, j: (0, j)),
            ],
            out_specs=pl.BlockSpec((tm, tn), lambda i, j: (i, j)),
            scratch_shapes=[pltpu.VMEM((tm, r), jnp.float32)],
        ),
        compiler_params=pltpu.CompilerParams(
            # Batch axis parallel (megacore shards only the x stream); the
            # out_features axis must be sequential for the h-scratch reuse.
            dimension_semantics=("parallel", "arbitrary"),
            vmem_limit_bytes=vmem_limit,
        ),
        cost_estimate=cost,
    )(x, w_down, w_up_t)


if __name__ == "__main__":
    # Small shapes consistent with the module (r=4, alpha=16). out_features is a
    # multiple of 128 so output tiles are lane-dense; tm=8 / tn=128 exercise a
    # real 2x2 grid (and the j==0 h-scratch reuse path) even at toy sizes.
    batch, in_features, out_features, r, alpha = 16, 32, 256, 4, 16

    key = jax.random.PRNGKey(0)
    kx, kd, ku = jax.random.split(key, 3)

    x = jax.random.normal(kx, (batch, in_features), dtype=jnp.float32)
    # The PyTorch __init__ zero-initializes both LoRA weights (output would be
    # identically zero); use deterministic random weights of the same shapes so
    # the compute path is actually exercised.
    w_down = jax.random.normal(kd, (r, in_features), dtype=jnp.float32) * 0.1
    w_up = jax.random.normal(ku, (out_features, r), dtype=jnp.float32) * 0.1

    # Pure-JAX reference of the exact forward semantics.
    ref = (x @ w_down.T @ w_up.T) * (alpha / r)

    # --- f32 path, explicit 2x2 grid (exercises the scratch reuse) ---
    out = lora_forward(x, w_down, w_up, alpha=alpha, tm=8, tn=128)
    out = jax.block_until_ready(out)
    assert out.shape == (batch, out_features)
    assert jnp.allclose(out, ref, atol=1e-5, rtol=1e-5)

    # --- bf16 HBM-facing path (recommended for real workloads), auto tiles ---
    out_bf16 = lora_forward(
        x.astype(jnp.bfloat16),
        w_down.astype(jnp.bfloat16),
        w_up.astype(jnp.bfloat16),
        alpha=alpha,
    )
    out_bf16 = jax.block_until_ready(out_bf16)
    assert out_bf16.dtype == jnp.bfloat16
    assert jnp.allclose(out_bf16.astype(jnp.float32), ref, atol=5e-2, rtol=5e-2)

    print("KERNEL_OK")
</pallas_src>

<mosaic_0001>
module attributes {stable_mosaic.version = 11 : i64} {
  func.func @_lora_kernel(%arg0: i32, %arg1: i32, %arg2: memref<8x32xf32, #tpu.memory_space<vmem>>, %arg3: memref<4x32xf32, #tpu.memory_space<vmem>>, %arg4: memref<4x128xf32, #tpu.memory_space<vmem>>, %arg5: memref<8x128xf32, #tpu.memory_space<vmem>>, %arg6: memref<8x4xf32, #tpu.memory_space<vmem>>) attributes {dimension_semantics = [#tpu.dimension_semantics<parallel>, #tpu.dimension_semantics<arbitrary>], iteration_bounds = array<i64: 2, 2>, scalar_prefetch = 0 : i64, scratch_operands = 1 : i64, tpu.core_type = #tpu.core_type<tc>, window_params = [{transform_indices = @transform_0, window_bounds = array<i64: 8, 32>}, {pipeline_mode = #tpu.pipeline_mode<synchronous>, transform_indices = @transform_1, window_bounds = array<i64: 4, 32>}, {transform_indices = @transform_2, window_bounds = array<i64: 4, 128>}, {transform_indices = @transform_3, window_bounds = array<i64: 8, 128>}]} {
    %c0_i32 = arith.constant 0 : i32
    %0 = arith.cmpi eq, %arg1, %c0_i32 : i32
    %1 = arith.extui %0 : i1 to i32
    %c0_i32_0 = arith.constant 0 : i32
    %2 = arith.cmpi ne, %1, %c0_i32_0 : i32
    scf.if %2 {
      %c0_6 = arith.constant 0 : index
      %c0_7 = arith.constant 0 : index
      %7 = vector.load %arg2[%c0_6, %c0_7] : memref<8x32xf32, #tpu.memory_space<vmem>>, vector<8x32xf32>
      %c0_8 = arith.constant 0 : index
      %c0_9 = arith.constant 0 : index
      %8 = vector.load %arg3[%c0_8, %c0_9] : memref<4x32xf32, #tpu.memory_space<vmem>>, vector<4x32xf32>
      %cst_10 = arith.constant dense<0.000000e+00> : vector<8x4xf32>
      %9 = tpu.matmul %7, %8, %cst_10 {dimension_numbers = #tpu.dot_dimension_numbers<[1], [1], [0], [0], [0, 0, 1, 0], [], []>} : vector<8x32xf32>, vector<4x32xf32>, vector<8x4xf32> -> vector<8x4xf32>
      %c0_11 = arith.constant 0 : index
      %c0_12 = arith.constant 0 : index
      %10 = vector.load %arg6[%c0_11, %c0_12] : memref<8x4xf32, #tpu.memory_space<vmem>>, vector<8x4xf32>
      tpu.vector_store %arg6[%c0_11, %c0_12], %9 {strides = array<i32>} : memref<8x4xf32, #tpu.memory_space<vmem>>, vector<8x4xf32>,
    } else {
    }
    %c0 = arith.constant 0 : index
    %c0_1 = arith.constant 0 : index
    %3 = vector.load %arg6[%c0, %c0_1] : memref<8x4xf32, #tpu.memory_space<vmem>>, vector<8x4xf32>
    %c0_2 = arith.constant 0 : index
    %c0_3 = arith.constant 0 : index
    %4 = vector.load %arg4[%c0_2, %c0_3] : memref<4x128xf32, #tpu.memory_space<vmem>>, vector<4x128xf32>
    %cst = arith.constant dense<0.000000e+00> : vector<8x128xf32>
    %5 = tpu.matmul %3, %4, %cst {dimension_numbers = #tpu.dot_dimension_numbers<[1], [0], [0], [1], [0, 0, 1, 1], [], []>} : vector<8x4xf32>, vector<4x128xf32>, vector<8x128xf32> -> vector<8x128xf32>
    %c0_4 = arith.constant 0 : index
    %c0_5 = arith.constant 0 : index
    %6 = vector.load %arg5[%c0_4, %c0_5] : memref<8x128xf32, #tpu.memory_space<vmem>>, vector<8x128xf32>
    tpu.vector_store %arg5[%c0_4, %c0_5], %5 {strides = array<i32>} : memref<8x128xf32, #tpu.memory_space<vmem>>, vector<8x128xf32>,
    return
  }
  func.func @transform_0(%arg0: i32, %arg1: i32) -> (i32, i32) {
    %c0_i32 = arith.constant 0 : i32
    %c0_i32_0 = arith.constant 0 : i32
    return %arg0, %c0_i32 : i32, i32
  }
  func.func @transform_1(%arg0: i32, %arg1: i32) -> (i32, i32) {
    %c0_i32 = arith.constant 0 : i32
    %c0_i32_0 = arith.constant 0 : i32
    %c0_i32_1 = arith.constant 0 : i32
    return %c0_i32, %c0_i32_0 : i32, i32
  }
  func.func @transform_2(%arg0: i32, %arg1: i32) -> (i32, i32) {
    %c0_i32 = arith.constant 0 : i32
    %c0_i32_0 = arith.constant 0 : i32
    return %c0_i32, %arg1 : i32, i32
  }
  func.func @transform_3(%arg0: i32, %arg1: i32) -> (i32, i32) {
    %c0_i32 = arith.constant 0 : i32
    return %arg0, %arg1 : i32, i32
  }
}

</mosaic_0001>

<llo_original>
// kernel: tpu_custom_call.1
$region0: #{tpu_custom_call.1}
  #allocation0 [shape = 'u32[]', space=smem, size = 0x4, offset = 0x4, fixed_abs, tag = 'smem constant byte address 0x4 - core index']
  #allocation1 [shape = 'u32[144,128]{1,0:T(1,128)}', space=vmem, size = 0x12000, scoped, tag = 'internal scratch']
  #allocation2 [shape = 'f32[8,4]{1,0:T(8,128)}', space=vmem, size = 0x1000, scoped, tag = 'scratch operand']
  %s0 = inlined_call_operand.hbm [shape: f32[16,32], index: 0, kind: input, shape index: {}]
  %s1 = inlined_call_operand.hbm [shape: f32[4,32], index: 1, kind: input, shape index: {}]
  %s2 = inlined_call_operand.hbm [shape: f32[4,256], index: 2, kind: input, shape index: {}]
  %s3 = inlined_call_operand.hbm [shape: f32[16,256], index: 3, kind: output, shape index: {}]
  %s4 = sld [smem:[#allocation0]]
  $region61: #{tpu_custom_call.1} parent=0
    _
  %s6 = ssub.s32 1, %s4
  %s7 = scalar_select 0, %s6, %s4
  $region1: #{tpu_custom_call.1} parent=0
    #allocation3 [shape = 'u8[8192]{0}', space=vmem, size = 0x2000, scoped, tag = 'input window, operand 0']
    #allocation4 [shape = 's32[2]{0}', space=sflag, size = 0x8, scoped, tag = 'scoped memory for tpu_custom_call.1']
    #allocation5 [shape = 's32[2]{0}', space=sflag, size = 0x8, scoped, tag = 'scoped memory for tpu_custom_call.1']
    #allocation6 [shape = 'u8[2048]{0}', space=vmem, size = 0x800, scoped, tag = 'input window, operand 1, single buffered']
    #allocation7 [shape = 's32[1]{0}', space=sflag, size = 0x4, scoped, tag = 'scoped memory for tpu_custom_call.1']
    #allocation8 [shape = 'u8[4096]{0}', space=vmem, size = 0x1000, scoped, tag = 'input window, operand 2']
    #allocation9 [shape = 'u8[8192]{0}', space=vmem, size = 0x2000, scoped, tag = 'output window, operand 0']
    %8 = vsyncpa [#allocation4], 0
    %s9 = scalar_lea.sflag [#allocation4], 1
    %10 = vsyncpa %s9, 0
    %11 = vsyncpa [#allocation7], 0
    %12 = vsyncpa [#allocation5], 0
    %s13 = scalar_lea.sflag [#allocation5], 1
    %14 = vsyncpa %s13, 0
    loop: start=0, step=1, limit=6
    $region2: #{tpu_custom_call.1} parent=1 // loop_pre_header
      _
    $region3: #{tpu_custom_call.1} parent=1 // loop_header
      %s16 = sphi 0, %s20
      %p17 = scmp.ge.s32.totalorder %s16, 6
      %s23 = sphi 0, %s35
      %s24 = sphi 0, %s31
      %s25 = sphi 0, %s23
      %s26 = sphi 0, %s24
      %s27 = sphi 0, %s25
      %s28 = sphi 0, %s26
      %s38 = sphi 0, %s40
      %s41 = sphi 0, %s38
      %s42 = sphi 0, %s41
      %s58 = sphi 0, %s42
      %s62 = sphi 0, %s62
      %s64 = sphi 0, %s62
      %s65 = sphi 0, %s64
      %s79 = sphi 0, %s65
      %s85 = sphi 0, %s87
      %s88 = sphi 0, %s85
      %s89 = sphi 0, %s88
      %s105 = sphi 0, %s89
      %s113 = sphi 0, %s115
      %s116 = sphi 0, %s113
      %s117 = sphi 0, %s116
      %s133 = sphi 0, %s117
    $region4: #{tpu_custom_call.1} parent=1 // loop_header_branch
      %19 = sbr.rel (%p17) target = $region8
    $region5: #{tpu_custom_call.1} parent=1 // loop_body
      %s21 = ssub.s32 %s16, 1
      %s22 = ssub.s32 %s16, 2
      %s29 = sadd.s32 1, %s24
      %p30 = scmp.ge.s32.totalorder %s29, 2
      %s31 = scalar_select %p30, 0, %s29
      %s32 = sadd.s32 1, %s23
      %s33 = scalar_select %p30, %s32, %s23
      %p34 = scmp.ge.s32.totalorder %s33, 2
      %s35 = scalar_select %p34, 0, %s33
      %s36 = ssub.s32 %s23, %s35
      %p37 = scmp.eq.s32.totalorder %s36, 0
      %s39 = sadd.s32 %s38, 1
      %s40 = scalar_select %p37, %s38, %s39
      %p43 = pneg %p37
      %p44 = scmp.eq.s32.totalorder %s16, 3
      %p45 = por %p43, %p44
      %p46 = scmp.ne.s32.totalorder %s38, %s41
      %p47 = scmp.eq.s32.totalorder %s16, 0
      %p48 = por %p46, %p47
      %p49 = scmp.ne.s32.totalorder %s38, %s41
      %p50 = scmp.eq.s32.totalorder %s21, 3
      %p51 = por %p49, %p50
      %p52 = scmp.ne.s32.totalorder %s41, %s42
      %p53 = scmp.eq.s32.totalorder %s21, 0
      %p54 = por %p52, %p53
      %p55 = scmp.ne.s32.totalorder %s41, %s42
      %p56 = scmp.eq.s32.totalorder %s22, 3
      %p57 = por %p55, %p56
      %p59 = scmp.ne.s32.totalorder %s42, %s58
      %p60 = scmp.eq.s32.totalorder %s22, 0
      %p61 = por %p59, %p60
      %s63 = sadd.s32 %s62, 1
      %p66 = scmp.eq.s32.totalorder %s16, 3
      %p67 = scmp.ne.s32.totalorder %s62, %s64
      %p68 = scmp.eq.s32.totalorder %s16, 0
      %p69 = por %p67, %p68
      %p70 = scmp.ne.s32.totalorder %s62, %s64
      %p71 = scmp.eq.s32.totalorder %s21, 3
      %p72 = por %p70, %p71
      %p73 = scmp.ne.s32.totalorder %s64, %s65
      %p74 = scmp.eq.s32.totalorder %s21, 0
      %p75 = por %p73, %p74
      %p76 = scmp.ne.s32.totalorder %s64, %s65
      %p77 = scmp.eq.s32.totalorder %s22, 3
      %p78 = por %p76, %p77
      %p80 = scmp.ne.s32.totalorder %s65, %s79
      %p81 = scmp.eq.s32.totalorder %s22, 0
      %p82 = por %p80, %p81
      %s83 = ssub.s32 %s24, %s31
      %p84 = scmp.eq.s32.totalorder %s83, 0
      %s86 = sadd.s32 %s85, 1
      %s87 = scalar_select %p84, %s85, %s86
      %p90 = pneg %p84
      %p91 = scmp.eq.s32.totalorder %s16, 3
      %p92 = por %p90, %p91
      %p93 = scmp.ne.s32.totalorder %s85, %s88
      %p94 = scmp.eq.s32.totalorder %s16, 0
      %p95 = por %p93, %p94
      %p96 = scmp.ne.s32.totalorder %s85, %s88
      %p97 = scmp.eq.s32.totalorder %s21, 3
      %p98 = por %p96, %p97
      %p99 = scmp.ne.s32.totalorder %s88, %s89
      %p100 = scmp.eq.s32.totalorder %s21, 0
      %p101 = por %p99, %p100
      %p102 = scmp.ne.s32.totalorder %s88, %s89
      %p103 = scmp.eq.s32.totalorder %s22, 3
      %p104 = por %p102, %p103
      %p106 = scmp.ne.s32.totalorder %s89, %s105
      %p107 = scmp.eq.s32.totalorder %s22, 0
      %p108 = por %p106, %p107
      %s109 = ssub.s32 %s23, %s35
      %s110 = ssub.s32 %s24, %s31
      %s111 = sor.u32 %s109, %s110
      %p112 = scmp.eq.s32.totalorder %s111, 0
      %s114 = sadd.s32 %s113, 1
      %s115 = scalar_select %p112, %s113, %s114
      %p118 = pneg %p112
      %p119 = scmp.eq.s32.totalorder %s16, 3
      %p120 = por %p118, %p119
      %p121 = scmp.ne.s32.totalorder %s113, %s116
      %p122 = scmp.eq.s32.totalorder %s16, 0
      %p123 = por %p121, %p122
      %p124 = scmp.ne.s32.totalorder %s113, %s116
      %p125 = scmp.eq.s32.totalorder %s21, 3
      %p126 = por %p124, %p125
      %p127 = scmp.ne.s32.totalorder %s116, %s117
      %p128 = scmp.eq.s32.totalorder %s21, 0
      %p129 = por %p127, %p128
      %p130 = scmp.ne.s32.totalorder %s116, %s117
      %p131 = scmp.eq.s32.totalorder %s22, 3
      %p132 = por %p130, %p131
      %p134 = scmp.ne.s32.totalorder %s117, %s133
      %p135 = scmp.eq.s32.totalorder %s22, 0
      %p136 = por %p134, %p135
      %p137 = scmp.le.s32.totalorder 1, %s16
      %p138 = scmp.lt.s32.totalorder %s16, 5
      %p139 = pnand %p137, %p138
      %p140 = pneg %p139
      // Predicated region
      $region9: #{tpu_custom_call.1} parent=5 // pred_check
        _
      $region10: #{tpu_custom_call.1} parent=5 // pred_check_branch
        %142 = sbr.rel (%p139) target = $region12
      $region11: #{tpu_custom_call.1} parent=5 // pred_region
        %s143 = ssub.s32 %s16, 1
        // Predicated region
        $region13: #{tpu_custom_call.1} parent=11 // pred_check
          %p144 = pneg %p75
        $region14: #{tpu_custom_call.1} parent=11 // pred_check_branch
          %146 = sbr.rel (%p144) target = $region16
        $region15: #{tpu_custom_call.1} parent=11 // pred_region
          %s148 = ssub.s32 64, 64
          %149 = vsyncadd [#allocation7], %s148
          %s151 = sshll.u32 [#allocation6], 4
          %s152 = int_to_ptr.vmem [resolvable:$true] %s151
          %154 = dma.hbm_to_vmem [thread:$0]  %s1, 64, %s152, [#allocation7]
        $region16: #{tpu_custom_call.1} parent=11 // pred_fallthru
          _
      $region12: #{tpu_custom_call.1} parent=5 // pred_fallthru
        _
      %p155 = scmp.lt.s32.totalorder %s16, 4
      // Predicated region
      $region17: #{tpu_custom_call.1} parent=5 // pred_check
        %p156 = pneg %p155
      $region18: #{tpu_custom_call.1} parent=5 // pred_check_branch
        %158 = sbr.rel (%p156) target = $region20
      $region19: #{tpu_custom_call.1} parent=5 // pred_region
        // Predicated region
        $region21: #{tpu_custom_call.1} parent=19 // pred_check
          %p159 = pneg %p48
        $region22: #{tpu_custom_call.1} parent=19 // pred_check_branch
          %161 = sbr.rel (%p159) target = $region24
        $region23: #{tpu_custom_call.1} parent=19 // pred_region
          %s162 = sand.u32 %s16, 1
          %s163 = scalar_lea.sflag [#allocation4], %s162
          %s164 = sand.u32 %s38, 1
          %s165 = smul.addr %s164, 8
          %s166 = scalar_lea.vmem [#allocation3], %s165
          %s168 = ssub.s32 128, 128
          %169 = vsyncadd %s163, %s168
          %s170 = smul.addr %s23, 128
          %s171 = scalar_lea.hbm %s0, %s170
          %s173 = sshll.u32 %s166, 4
          %s174 = int_to_ptr.vmem [resolvable:$true] %s173
          %176 = dma.hbm_to_vmem [thread:$0]  %s171, 128, %s174, %s163
        $region24: #{tpu_custom_call.1} parent=19 // pred_fallthru
          _
        // Predicated region
        $region25: #{tpu_custom_call.1} parent=19 // pred_check
          %p177 = pneg %p95
        $region26: #{tpu_custom_call.1} parent=19 // pred_check_branch
          %179 = sbr.rel (%p177) target = $region28
        $region27: #{tpu_custom_call.1} parent=19 // pred_region
          %s180 = sand.u32 %s16, 1
          %s181 = scalar_lea.sflag [#allocation4], %s180
          %s182 = sand.u32 %s85, 1
          %s183 = smul.addr %s182, 4
          %s184 = scalar_lea.vmem [#allocation8], %s183
          %s186 = ssub.s32 64, 64
          %187 = vsyncadd %s181, %s186
          %s188 = smul.addr %s24, 64
          %s189 = scalar_lea.hbm %s2, %s188
          %s191 = sshll.u32 %s184, 4
          %s192 = int_to_ptr.vmem [resolvable:$true] %s191
          %194 = dma.hbm_to_vmem [thread:$0]  %s189, 64, %s192, %s181
        $region28: #{tpu_custom_call.1} parent=19 // pred_fallthru
          _
      $region20: #{tpu_custom_call.1} parent=5 // pred_fallthru
        _
      %p195 = scmp.le.s32.totalorder 1, %s16
      %p196 = scmp.lt.s32.totalorder %s16, 5
      %p197 = pnand %p195, %p196
      %p198 = pneg %p197
      // Predicated region
      $region29: #{tpu_custom_call.1} parent=5 // pred_check
        _
      $region30: #{tpu_custom_call.1} parent=5 // pred_check_branch
        %200 = sbr.rel (%p197) target = $region32
      $region31: #{tpu_custom_call.1} parent=5 // pred_region
        %s201 = ssub.s32 %s16, 1
        %s202 = sand.u32 %s21, 1
        %s203 = scalar_lea.sflag [#allocation4], %s202
        %s204 = sand.u32 %s41, 1
        %s205 = smul.addr %s204, 8
        %s206 = scalar_lea.vmem [#allocation3], %s205
        // Predicated region
        $region33: #{tpu_custom_call.1} parent=31 // pred_check
          %p207 = pneg %p54
        $region34: #{tpu_custom_call.1} parent=31 // pred_check_branch
          %209 = sbr.rel (%p207) target = $region36
        $region35: #{tpu_custom_call.1} parent=31 // pred_region
          %210 = dma.done %s203, 128
        $region36: #{tpu_custom_call.1} parent=31 // pred_fallthru
          _
        // Predicated region
        $region37: #{tpu_custom_call.1} parent=31 // pred_check
          %p211 = pneg %p75
        $region38: #{tpu_custom_call.1} parent=31 // pred_check_branch
          %213 = sbr.rel (%p211) target = $region40
        $region39: #{tpu_custom_call.1} parent=31 // pred_region
          %214 = dma.done [#allocation7], 64
        $region40: #{tpu_custom_call.1} parent=31 // pred_fallthru
          _
        %s215 = sand.u32 %s21, 1
        %s216 = scalar_lea.sflag [#allocation4], %s215
        %s217 = sand.u32 %s88, 1
        %s218 = smul.addr %s217, 4
        %s219 = scalar_lea.vmem [#allocation8], %s218
        // Predicated region
        $region41: #{tpu_custom_call.1} parent=31 // pred_check
          %p220 = pneg %p101
        $region42: #{tpu_custom_call.1} parent=31 // pred_check_branch
          %222 = sbr.rel (%p220) target = $region44
        $region43: #{tpu_custom_call.1} parent=31 // pred_region
          %223 = dma.done %s216, 64
        $region44: #{tpu_custom_call.1} parent=31 // pred_fallthru
          _
        %s224 = sand.u32 %s21, 1
        %s225 = scalar_lea.sflag [#allocation4], %s224
        %s226 = sand.u32 %s41, 1
        %s227 = smul.addr %s226, 8
        %s228 = scalar_lea.vmem [#allocation3], %s227
        %p229 = pneg %p54
        %p230 = pneg %p51
        %p231 = pneg %p75
        %p232 = pneg %p72
        %s233 = sand.u32 %s21, 1
        %s234 = scalar_lea.sflag [#allocation4], %s233
        %s235 = sand.u32 %s88, 1
        %s236 = smul.addr %s235, 4
        %s237 = scalar_lea.vmem [#allocation8], %s236
        %p238 = pneg %p101
        %p239 = pneg %p98
        %p240 = pneg %p129
        %p241 = pneg %p126
        %s242 = sand.u32 %s116, 1
        %s243 = scalar_lea.sflag [#allocation5], %s242
        %s244 = sand.u32 %s116, 1
        %s245 = smul.addr %s244, 8
        %s246 = scalar_lea.vmem [#allocation9], %s245
        %p247 = scmp.eq.s32.totalorder %s26, 0
        // Predicated region
        $region45: #{tpu_custom_call.1} parent=31 // pred_check
          %p248 = pneg %p247
        $region46: #{tpu_custom_call.1} parent=31 // pred_check_branch
          %250 = sbr.rel (%p248) target = $region48
        $region47: #{tpu_custom_call.1} parent=31 // pred_region
          %v251 = vld [vmem:[%s206] sm:$0xff]
          %v252 = vld [vmem:[#allocation6] sm:$0xf]
          %vm253 = vcmask 261120
          %v255 = vsel %vm253, %v251, 0
          %v258 = vsel %vm253, %v252, 0
          %260 = vmatprep.subr.mxu0 0.0
          %261 = vmatpush1.xpose.msra.mxu0 0.0
          %262 = vmatprep.subr.mxu0 0.0
          %263 = vmatpush1.xpose.msra.mxu0 0.0
          %264 = vmatprep.subr.mxu0 0.0
          %265 = vmatpush1.xpose.msra.mxu0 0.0
          %266 = vmatprep.subr.mxu0 0.0
          %267 = vmatpush1.xpose.msra.mxu0 0.0
          %268 = vmatprep.subr.mxu0 0.0
          %269 = vmatpush1.xpose.msra.mxu0 0.0
          %270 = vmatprep.subr.mxu0 0.0
          %271 = vmatpush1.xpose.msra.mxu0 0.0
          %272 = vmatprep.subr.mxu0 0.0
          %273 = vmatpush1.xpose.msra.mxu0 0.0
          %274 = vmatprep.subr.mxu0 0.0
          %275 = vmatpush1.xpose.msra.mxu0 0.0
          %276 = vmatprep.subr.mxu0 0.0
          %277 = vmatpush1.xpose.msra.mxu0 0.0
          %278 = vmatprep.subr.mxu0 0.0
          %279 = vmatpush1.xpose.msra.mxu0 0.0
          %280 = vmatprep.subr.mxu0 0.0
          %281 = vmatpush1.xpose.msra.mxu0 0.0
          %282 = vmatprep.subr.mxu0 0.0
          %283 = vmatpush1.xpose.msra.mxu0 0.0
          %284 = vmatprep.subr.mxu0 0.0
          %285 = vmatpush1.xpose.msra.mxu0 0.0
          %286 = vmatprep.subr.mxu0 0.0
          %287 = vmatpush1.xpose.msra.mxu0 0.0
          %288 = vmatprep.subr.mxu0 0.0
          %289 = vmatpush1.xpose.msra.mxu0 0.0
          %290 = vmatprep.subr.mxu0 0.0
          %291 = vmatpush1.xpose.msra.mxu0 %v258
          %292 = vmatprep.subr.mxu0 0.0
          %293 = vmatpush2.xpose.msra.mxu0 0.0
          %294 = vmatprep.subr.mxu0 0.0
          %295 = vmatpush2.xpose.msra.mxu0 0.0
          %296 = vmatprep.subr.mxu0 0.0
          %297 = vmatpush2.xpose.msra.mxu0 0.0
          %298 = vmatprep.subr.mxu0 0.0
          %299 = vmatpush2.xpose.msra.mxu0 0.0
          %300 = vmatprep.subr.mxu0 0.0
          %301 = vmatpush2.xpose.msra.mxu0 0.0
          %302 = vmatprep.subr.mxu0 0.0
          %303 = vmatpush2.xpose.msra.mxu0 0.0
          %304 = vmatprep.subr.mxu0 0.0
          %305 = vmatpush2.xpose.msra.mxu0 0.0
          %306 = vmatprep.subr.mxu0 0.0
          %307 = vmatpush2.xpose.msra.mxu0 0.0
          %308 = vmatprep.subr.mxu0 0.0
          %309 = vmatpush2.xpose.msra.mxu0 0.0
          %310 = vmatprep.subr.mxu0 0.0
          %311 = vmatpush2.xpose.msra.mxu0 0.0
          %312 = vmatprep.subr.mxu0 0.0
          %313 = vmatpush2.xpose.msra.mxu0 0.0
          %314 = vmatprep.subr.mxu0 0.0
          %315 = vmatpush2.xpose.msra.mxu0 0.0
          %316 = vmatprep.subr.mxu0 0.0
          %317 = vmatpush2.xpose.msra.mxu0 0.0
          %318 = vmatprep.subr.mxu0 0.0
          %319 = vmatpush2.xpose.msra.mxu0 0.0
          %320 = vmatprep.subr.mxu0 0.0
          %321 = vmatpush2.xpose.msra.mxu0 0.0
          %322 = vmatprep.subr.mxu0 0.0
          %323 = vmatpush2.xpose.msra.mxu0 0.0
          %324 = vmatprep.mubr.f32.mxu0 0.0
          %325 = vmatmul.mubr.f32.gmra.mxu0 %v255
          %v326 = vpop.f32.mrf.mxu0
          %v327 = vadd.f32 0.0, %v326
          %v328 = vpop.f32.mrf.mxu0
          %329 = vdwg.mxu0
          %vm330 = vcmask 31744
          %331 = vst.msk [vmem:[#allocation2] sm:$0xff] %vm330, %v327
        $region48: #{tpu_custom_call.1} parent=31 // pred_fallthru
          _
        %v332 = vld [vmem:[#allocation2] sm:$0xff]
        %v333 = vld [vmem:[%s219] sm:$0xf]
        %vm334 = vcmask 31744
        %v336 = vsel %vm334, %v332, 0
        %vm338 = vcmask 1043456
        %v340 = vsel %vm338, %v333, 0
        %342 = vmatprep.subr.mxu0 0.0
        %343 = vmatpush1.msra.mxu0 0.0
        %344 = vmatprep.subr.mxu0 0.0
        %345 = vmatpush1.msra.mxu0 0.0
        %346 = vmatprep.subr.mxu0 0.0
        %347 = vmatpush1.msra.mxu0 0.0
        %348 = vmatprep.subr.mxu0 0.0
        %349 = vmatpush1.msra.mxu0 0.0
        %350 = vmatprep.subr.mxu0 0.0
        %351 = vmatpush1.msra.mxu0 0.0
        %352 = vmatprep.subr.mxu0 0.0
        %353 = vmatpush1.msra.mxu0 0.0
        %354 = vmatprep.subr.mxu0 0.0
        %355 = vmatpush1.msra.mxu0 0.0
        %356 = vmatprep.subr.mxu0 0.0
        %357 = vmatpush1.msra.mxu0 0.0
        %358 = vmatprep.subr.mxu0 0.0
        %359 = vmatpush1.msra.mxu0 0.0
        %360 = vmatprep.subr.mxu0 0.0
        %361 = vmatpush1.msra.mxu0 0.0
        %362 = vmatprep.subr.mxu0 0.0
        %363 = vmatpush1.msra.mxu0 0.0
        %364 = vmatprep.subr.mxu0 0.0
        %365 = vmatpush1.msra.mxu0 0.0
        %366 = vmatprep.subr.mxu0 0.0
        %367 = vmatpush1.msra.mxu0 0.0
        %368 = vmatprep.subr.mxu0 0.0
        %369 = vmatpush1.msra.mxu0 0.0
        %370 = vmatprep.subr.mxu0 0.0
        %371 = vmatpush1.msra.mxu0 0.0
        %372 = vmatprep.subr.mxu0 0.0
        %373 = vmatpush1.msra.mxu0 %v340
        %374 = vmatprep.subr.mxu0 0.0
        %375 = vmatpush2.msra.mxu0 0.0
        %376 = vmatprep.subr.mxu0 0.0
        %377 = vmatpush2.msra.mxu0 0.0
        %378 = vmatprep.subr.mxu0 0.0
        %379 = vmatpush2.msra.mxu0 0.0
        %380 = vmatprep.subr.mxu0 0.0
        %381 = vmatpush2.msra.mxu0 0.0
        %382 = vmatprep.subr.mxu0 0.0
        %383 = vmatpush2.msra.mxu0 0.0
        %384 = vmatprep.subr.mxu0 0.0
        %385 = vmatpush2.msra.mxu0 0.0
        %386 = vmatprep.subr.mxu0 0.0
        %387 = vmatpush2.msra.mxu0 0.0
        %388 = vmatprep.subr.mxu0 0.0
        %389 = vmatpush2.msra.mxu0 0.0
        %390 = vmatprep.subr.mxu0 0.0
        %391 = vmatpush2.msra.mxu0 0.0
        %392 = vmatprep.subr.mxu0 0.0
        %393 = vmatpush2.msra.mxu0 0.0
        %394 = vmatprep.subr.mxu0 0.0
        %395 = vmatpush2.msra.mxu0 0.0
        %396 = vmatprep.subr.mxu0 0.0
        %397 = vmatpush2.msra.mxu0 0.0
        %398 = vmatprep.subr.mxu0 0.0
        %399 = vmatpush2.msra.mxu0 0.0
        %400 = vmatprep.subr.mxu0 0.0
        %401 = vmatpush2.msra.mxu0 0.0
        %402 = vmatprep.subr.mxu0 0.0
        %403 = vmatpush2.msra.mxu0 0.0
        %404 = vmatprep.subr.mxu0 0.0
        %405 = vmatpush2.msra.mxu0 0.0
        %406 = vmatprep.mubr.f32.mxu0 0.0
        %407 = vmatmul.mubr.f32.gmra.mxu0 %v336
        %v408 = vpop.f32.mrf.mxu0
        %v409 = vadd.f32 0.0, %v408
        %v410 = vpop.f32.mrf.mxu0
        %411 = vdwg.mxu0
        %412 = vst [vmem:[%s246] sm:$0xff] %v409
        %s413 = sand.u32 %s116, 1
        %s414 = scalar_lea.sflag [#allocation5], %s413
        %s415 = sand.u32 %s116, 1
        %s416 = smul.addr %s415, 8
        %s417 = scalar_lea.vmem [#allocation9], %s416
        // Predicated region
        $region49: #{tpu_custom_call.1} parent=31 // pred_check
          %p418 = pneg %p126
        $region50: #{tpu_custom_call.1} parent=31 // pred_check_branch
          %420 = sbr.rel (%p418) target = $region52
        $region51: #{tpu_custom_call.1} parent=31 // pred_region
          %s422 = ssub.s32 128, 128
          %423 = vsyncadd %s414, %s422
          %s424 = smul.addr %s25, 2
          %s425 = sadd.s32 %s26, %s424
          %s426 = smul.addr %s425, 128
          %s427 = scalar_lea.hbm %s3, %s426
          %s429 = sshll.u32 %s417, 4
          %s430 = int_to_ptr.vmem [resolvable:$true] %s429
          %432 = dma.vmem_to_hbm [thread:$0]  %s430, 128, %s427, %s414
        $region52: #{tpu_custom_call.1} parent=31 // pred_fallthru
          _
      $region32: #{tpu_custom_call.1} parent=5 // pred_fallthru
        _
      %p433 = scmp.le.s32.totalorder 2, %s16
      // Predicated region
      $region53: #{tpu_custom_call.1} parent=5 // pred_check
        %p434 = pneg %p433
      $region54: #{tpu_custom_call.1} parent=5 // pred_check_branch
        %436 = sbr.rel (%p434) target = $region56
      $region55: #{tpu_custom_call.1} parent=5 // pred_region
        %s437 = ssub.s32 %s16, 2
        // Predicated region
        $region57: #{tpu_custom_call.1} parent=55 // pred_check
          %p438 = pneg %p132
        $region58: #{tpu_custom_call.1} parent=55 // pred_check_branch
          %440 = sbr.rel (%p438) target = $region60
        $region59: #{tpu_custom_call.1} parent=55 // pred_region
          %s441 = sand.u32 %s117, 1
          %s442 = scalar_lea.sflag [#allocation5], %s441
          %s443 = sand.u32 %s117, 1
          %s444 = smul.addr %s443, 8
          %s445 = scalar_lea.vmem [#allocation9], %s444
          %446 = dma.done %s442, 128
        $region60: #{tpu_custom_call.1} parent=55 // pred_fallthru
          _
      $region56: #{tpu_custom_call.1} parent=5 // pred_fallthru
        _
    $region6: #{tpu_custom_call.1} parent=1 // loop_footer
      %s20 = sadd.s32 1, %s16
    $region7: #{tpu_custom_call.1} parent=1 // loop_footer_branch
      %15 = sbr.rel target = $region3
    $region8: #{tpu_custom_call.1} parent=1 // loop_exit
      _
    %447 = vsyncpa [#allocation4], 1
    %s448 = scalar_lea.sflag [#allocation4], 1
    %449 = vsyncpa %s448, 1
    %450 = vsyncpa [#allocation7], 1
    %451 = vsyncpa [#allocation5], 1
    %s452 = scalar_lea.sflag [#allocation5], 1
    %453 = vsyncpa %s452, 1

</llo_original>
